<compile_context>
chip_gen: v7x
topology: tpu7x:2x2x1
jax: 0.10.0
libtpu: 0.0.40
codegen_flags: <defaults>
</compile_context>

<pallas_src>
import math

import jax
import jax.numpy as jnp
from jax.experimental import pallas as pl
from jax.experimental.pallas import tpu as pltpu


def _gwl_kernel(x_ref, wd_ref, b_ref, o_ref):
    """One (class_tile, batch_tile) output block.

    x_ref : (TB, TC*D)  lane-dense flattened activations
    wd_ref: (TC, TC*D)  block-diagonal weights for this class tile
    b_ref : (TC, 1)     bias column
    o_ref : (TC, TB)    output block, batch on the lane axis
    """
    acc = jax.lax.dot_general(
        wd_ref[...], x_ref[...],
        dimension_numbers=(((1,), (1,)), ((), ())),   # A @ B^T, contracting C*D
        preferred_element_type=jnp.float32,           # f32 accumulation on the MXU
        precision=jax.lax.Precision.HIGHEST,          # keep full f32 products
    )
    o_ref[...] = (acc + b_ref[...]).astype(o_ref.dtype)


def _pick_tiles(B, C, D, itemsize, target_block_bytes):
    """Choose (batch_tile, class_tile) under BlockSpec (8,128) legality rules."""
    # Class tile: split C only when a single flattened row (C*D) is already big.
    tc = C
    if C * D * itemsize > target_block_bytes and D % 128 == 0:
        for cand in (8, 16, 32, 64):
            if C % cand == 0:
                tc = cand
                break
    # TODO(synk): extremely large C*D with D not 128-aligned would need an extra
    # K-reduction grid axis + VMEM accumulator; not required at these sizes.
    kt = tc * D

    # Batch tile: full B when small (block dim == array dim is always legal);
    # otherwise a multiple of 128 (lane-dense transposed-output stores) sized to
    # ~target_block_bytes while leaving >=2 grid steps so the pipeline overlaps.
    if B <= 128:
        tb = B
    else:
        full = (B // 128) * 128
        budget = max(128, (target_block_bytes // (kt * itemsize)) // 128 * 128)
        half = max(128, (full // 2) // 128 * 128)
        tb = min(budget, half)
    return tb, tc


def groupwise_linear(x, W, b, *, target_block_bytes=2 << 20):
    """x: (B, C, D); W: (C, D); b: (1, C). Returns (B, C) = (W*x).sum(-1) + b."""
    B, C, D = x.shape
    assert W.shape == (C, D) and b.shape == (1, C)

    itemsize = jnp.dtype(x.dtype).itemsize
    tb, tc = _pick_tiles(B, C, D, itemsize, target_block_bytes)
    g = C // tc
    kt = tc * D

    # Lane-dense flattening of the activations (free row-major reshape).
    xf = x.reshape(B, C * D)

    # One-time block-diagonal repack of the (tiny) weights:
    #   Wd[j*tc + c, c*D + d] = W[j*tc + c, d], zero elsewhere.
    eye = jnp.eye(tc, dtype=W.dtype)
    Wd = (eye[None, :, :, None] * W.reshape(g, tc, 1, D)).reshape(C, kt)
    b_col = b.reshape(C, 1)

    # Batch is the inner (fast) grid axis -> Wd / bias blocks stay VMEM-resident.
    grid = (g, pl.cdiv(B, tb))

    out_t = pl.pallas_call(
        _gwl_kernel,
        out_shape=jax.ShapeDtypeStruct((C, B), x.dtype),
        grid_spec=pltpu.PrefetchScalarGridSpec(
            num_scalar_prefetch=0,
            grid=grid,
            in_specs=[
                pl.BlockSpec((tb, kt), lambda j, i: (i, j)),   # x block
                pl.BlockSpec((tc, kt), lambda j, i: (j, 0)),   # weights (resident)
                pl.BlockSpec((tc, 1), lambda j, i: (j, 0)),    # bias    (resident)
            ],
            out_specs=pl.BlockSpec((tc, tb), lambda j, i: (j, i)),
        ),
        compiler_params=pltpu.CompilerParams(
            dimension_semantics=("parallel", "parallel"),      # megacore / 2-TC split
            vmem_limit_bytes=32 * 1024 * 1024,                 # explicit budget, safe v5e..v7x
        ),
    )(xf, Wd, b_col)

    # Tiny (C, B) -> (B, C) transpose outside the kernel.
    return out_t.T


def init_params(key, num_class, hidden_dim):
    """Matches reset_parameters: per-class uniform(-stdv, stdv)."""
    stdv = 1.0 / math.sqrt(hidden_dim)
    kw, kb = jax.random.split(key)
    W = jax.random.uniform(kw, (num_class, hidden_dim), jnp.float32,
                           minval=-stdv, maxval=stdv)
    b = jax.random.uniform(kb, (1, num_class), jnp.float32,
                           minval=-stdv, maxval=stdv)
    return W, b


if __name__ == "__main__":
    B, num_class, hidden_dim = 2, 8, 32

    key = jax.random.PRNGKey(0)
    kx, kp = jax.random.split(key)
    x = jax.random.normal(kx, (B, num_class, hidden_dim), jnp.float32)
    W, b = init_params(kp, num_class, hidden_dim)

    # Use bf16-representable test values so the check is insensitive to how many
    # passes the MXU uses for the f32 matmul (products are then exact in f32).
    x = x.astype(jnp.bfloat16).astype(jnp.float32)
    W = W.astype(jnp.bfloat16).astype(jnp.float32)

    out = jax.block_until_ready(groupwise_linear(x, W, b))

    # Reference: plain JAX, same math as the PyTorch forward.
    ref = jnp.sum(W[None, :, :] * x, axis=-1) + b
    assert out.shape == (B, num_class)
    assert jnp.allclose(out, ref, atol=1e-5, rtol=1e-5), \
        float(jnp.max(jnp.abs(out - ref)))

    print("KERNEL_OK")
</pallas_src>

<mosaic_0001>
module attributes {stable_mosaic.version = 11 : i64} {
  func.func @_gwl_kernel(%arg0: i32, %arg1: i32, %arg2: memref<2x256xf32, #tpu.memory_space<vmem>>, %arg3: memref<8x256xf32, #tpu.memory_space<vmem>>, %arg4: memref<8x1xf32, #tpu.memory_space<vmem>>, %arg5: memref<8x2xf32, #tpu.memory_space<vmem>>) attributes {dimension_semantics = [#tpu.dimension_semantics<parallel>, #tpu.dimension_semantics<parallel>], iteration_bounds = array<i64: 1, 1>, scalar_prefetch = 0 : i64, scratch_operands = 0 : i64, tpu.core_type = #tpu.core_type<tc>, window_params = [{transform_indices = @transform_0, window_bounds = array<i64: 2, 256>}, {transform_indices = @transform_1, window_bounds = array<i64: 8, 256>}, {transform_indices = @transform_2, window_bounds = array<i64: 8, 1>}, {transform_indices = @transform_3, window_bounds = array<i64: 8, 2>}]} {
    %c0 = arith.constant 0 : index
    %c0_0 = arith.constant 0 : index
    %0 = vector.load %arg3[%c0, %c0_0] : memref<8x256xf32, #tpu.memory_space<vmem>>, vector<8x256xf32>
    %c0_1 = arith.constant 0 : index
    %c0_2 = arith.constant 0 : index
    %1 = vector.load %arg2[%c0_1, %c0_2] : memref<2x256xf32, #tpu.memory_space<vmem>>, vector<2x256xf32>
    %cst = arith.constant dense<0.000000e+00> : vector<8x2xf32>
    %2 = tpu.matmul %0, %1, %cst {dimension_numbers = #tpu.dot_dimension_numbers<[1], [1], [0], [0], [0, 0, 1, 0], [], []>, precision = #tpu.contract_precision<fp32>} : vector<8x256xf32>, vector<2x256xf32>, vector<8x2xf32> -> vector<8x2xf32>
    %c0_3 = arith.constant 0 : index
    %c0_4 = arith.constant 0 : index
    %3 = vector.load %arg4[%c0_3, %c0_4] : memref<8x1xf32, #tpu.memory_space<vmem>>, vector<8x1xf32>
    %4 = vector.broadcast %3 : vector<8x1xf32> to vector<8x2xf32>
    %5 = arith.addf %2, %4 : vector<8x2xf32>
    %c0_5 = arith.constant 0 : index
    %c0_6 = arith.constant 0 : index
    %6 = vector.load %arg5[%c0_5, %c0_6] : memref<8x2xf32, #tpu.memory_space<vmem>>, vector<8x2xf32>
    tpu.vector_store %arg5[%c0_5, %c0_6], %5 {strides = array<i32>} : memref<8x2xf32, #tpu.memory_space<vmem>>, vector<8x2xf32>,
    return
  }
  func.func @transform_0(%arg0: i32, %arg1: i32) -> (i32, i32) {
    %c0_i32 = arith.constant 0 : i32
    return %arg1, %arg0 : i32, i32
  }
  func.func @transform_1(%arg0: i32, %arg1: i32) -> (i32, i32) {
    %c0_i32 = arith.constant 0 : i32
    %c0_i32_0 = arith.constant 0 : i32
    return %arg0, %c0_i32 : i32, i32
  }
  func.func @transform_2(%arg0: i32, %arg1: i32) -> (i32, i32) {
    %c0_i32 = arith.constant 0 : i32
    %c0_i32_0 = arith.constant 0 : i32
    return %arg0, %c0_i32 : i32, i32
  }
  func.func @transform_3(%arg0: i32, %arg1: i32) -> (i32, i32) {
    %c0_i32 = arith.constant 0 : i32
    return %arg0, %arg1 : i32, i32
  }
}

</mosaic_0001>

<llo_original>
// kernel: tpu_custom_call.1
$region0: #{tpu_custom_call.1}
  #allocation0 [shape = 'u32[]', space=smem, size = 0x4, offset = 0x4, fixed_abs, tag = 'smem constant byte address 0x4 - core index']
  #allocation1 [shape = 'u32[144,128]{1,0:T(1,128)}', space=vmem, size = 0x12000, scoped, tag = 'internal scratch']
  %s0 = inlined_call_operand.vmem [shape: f32[2,256], index: 0, kind: input, shape index: {}]
  %s1 = inlined_call_operand.hbm [shape: f32[8,256], index: 1, kind: input, shape index: {}]
  %s2 = inlined_call_operand.vmem [shape: f32[8,1], index: 2, kind: input, shape index: {}]
  %s3 = inlined_call_operand.vmem [shape: f32[8,2], index: 3, kind: output, shape index: {}]
  %s4 = sld [smem:[#allocation0]]
  $region26: #{tpu_custom_call.1} parent=0
    _
  %s6 = ssub.s32 1, %s4
  %s7 = scalar_select 0, %s6, %s4
  $region1: #{tpu_custom_call.1} parent=0
    #allocation2 [shape = 'u8[8192]{0}', space=vmem, size = 0x2000, scoped, tag = 'input window, operand 1, single buffered']
    #allocation3 [shape = 's32[1]{0}', space=sflag, size = 0x4, scoped, tag = 'scoped memory for tpu_custom_call.1']
    %8 = vsyncpa [#allocation3], 0
    // Predicated region
    $region2: #{tpu_custom_call.1} parent=1 // pred_check
      _
    $region3: #{tpu_custom_call.1} parent=1 // pred_check_branch
      %10 = sbr.rel (0) target = $region5
    $region4: #{tpu_custom_call.1} parent=1 // pred_region
      _
    $region5: #{tpu_custom_call.1} parent=1 // pred_fallthru
      _
    // Predicated region
    $region6: #{tpu_custom_call.1} parent=1 // pred_check
      _
    $region7: #{tpu_custom_call.1} parent=1 // pred_check_branch
      %12 = sbr.rel (0) target = $region9
    $region8: #{tpu_custom_call.1} parent=1 // pred_region
      %s14 = ssub.s32 256, 256
      %15 = vsyncadd [#allocation3], %s14
      %s17 = sshll.u32 [#allocation2], 4
      %s18 = int_to_ptr.vmem [resolvable:$true] %s17
      %20 = dma.hbm_to_vmem [thread:$0]  %s1, 256, %s18, [#allocation3]
    $region9: #{tpu_custom_call.1} parent=1 // pred_fallthru
      _
    // Predicated region
    $region10: #{tpu_custom_call.1} parent=1 // pred_check
      _
    $region11: #{tpu_custom_call.1} parent=1 // pred_check_branch
      %22 = sbr.rel (0) target = $region13
    $region12: #{tpu_custom_call.1} parent=1 // pred_region
      _
    $region13: #{tpu_custom_call.1} parent=1 // pred_fallthru
      _
    // Predicated region
    $region14: #{tpu_custom_call.1} parent=1 // pred_check
      _
    $region15: #{tpu_custom_call.1} parent=1 // pred_check_branch
      %24 = sbr.rel (0) target = $region17
    $region16: #{tpu_custom_call.1} parent=1 // pred_region
      %25 = dma.done [#allocation3], 256
    $region17: #{tpu_custom_call.1} parent=1 // pred_fallthru
      _
    %v26 = vld [vmem:[#allocation2] sm:$0xff]
    %v27 = vld [vmem:[#allocation2 + $0x8] sm:$0xff]
    %v28 = vld [vmem:[%s0] sm:$0xf]
    %v29 = vld [vmem:[%s2] sm:$0xff]
    %31 = vset.pattern.permute.xlu0 0
    %32 = vperm.xlu0 %31, %v29
    %v33 = vpop.permute.xlu0 %32
    %v37 = vunpack.c.l.s4 1983009808
    %v38 = vunpack.c.0.s8 %v37
    %v39 = vlaneseq
    %v40 = vshrl.u32 %v39, 7
    %v41 = vsub.s32 %v38, %v40
    %v42 = vrot.slane %v28, %v41
    %v43 = vcombine.high %v42, %v42
    %v46 = vand.u32 %v43, 4294901760
    %47 = vmatprep.subr.mxu0 %v46
    %v48 = vand.u32 %v42, 4294901760
    %49 = vmatpush1.xpose.msra.mxu0 %v48
    %50 = vmatprep.subr.mxu0 0.0
    %51 = vmatpush1.xpose.msra.mxu0 0.0
    %52 = vmatprep.subr.mxu0 0.0
    %53 = vmatpush1.xpose.msra.mxu0 0.0
    %54 = vmatprep.subr.mxu0 0.0
    %55 = vmatpush1.xpose.msra.mxu0 0.0
    %56 = vmatprep.subr.mxu0 0.0
    %57 = vmatpush1.xpose.msra.mxu0 0.0
    %58 = vmatprep.subr.mxu0 0.0
    %59 = vmatpush1.xpose.msra.mxu0 0.0
    %60 = vmatprep.subr.mxu0 0.0
    %61 = vmatpush1.xpose.msra.mxu0 0.0
    %62 = vmatprep.subr.mxu0 0.0
    %63 = vmatpush1.xpose.msra.mxu0 0.0
    %64 = vmatprep.subr.mxu0 0.0
    %65 = vmatpush1.xpose.msra.mxu0 0.0
    %66 = vmatprep.subr.mxu0 0.0
    %67 = vmatpush1.xpose.msra.mxu0 0.0
    %68 = vmatprep.subr.mxu0 0.0
    %69 = vmatpush1.xpose.msra.mxu0 0.0
    %70 = vmatprep.subr.mxu0 0.0
    %71 = vmatpush1.xpose.msra.mxu0 0.0
    %72 = vmatprep.subr.mxu0 0.0
    %73 = vmatpush1.xpose.msra.mxu0 0.0
    %74 = vmatprep.subr.mxu0 0.0
    %75 = vmatpush1.xpose.msra.mxu0 0.0
    %76 = vmatprep.subr.mxu0 0.0
    %77 = vmatpush1.xpose.msra.mxu0 0.0
    %78 = vmatprep.subr.mxu0 0.0
    %79 = vmatpush1.xpose.msra.mxu0 0.0
    %80 = vmatprep.subr.mxu0 0.0
    %81 = vmatpush1.xpose.msra.mxu0 0.0
    %82 = vmatprep.subr.mxu0 0.0
    %83 = vmatpush1.xpose.msra.mxu0 0.0
    %84 = vmatprep.subr.mxu0 0.0
    %85 = vmatpush1.xpose.msra.mxu0 0.0
    %86 = vmatprep.subr.mxu0 0.0
    %87 = vmatpush1.xpose.msra.mxu0 0.0
    %88 = vmatprep.subr.mxu0 0.0
    %89 = vmatpush1.xpose.msra.mxu0 0.0
    %90 = vmatprep.subr.mxu0 0.0
    %91 = vmatpush1.xpose.msra.mxu0 0.0
    %92 = vmatprep.subr.mxu0 0.0
    %93 = vmatpush1.xpose.msra.mxu0 0.0
    %94 = vmatprep.subr.mxu0 0.0
    %95 = vmatpush1.xpose.msra.mxu0 0.0
    %96 = vmatprep.subr.mxu0 0.0
    %97 = vmatpush1.xpose.msra.mxu0 0.0
    %98 = vmatprep.subr.mxu0 0.0
    %99 = vmatpush1.xpose.msra.mxu0 0.0
    %100 = vmatprep.subr.mxu0 0.0
    %101 = vmatpush1.xpose.msra.mxu0 0.0
    %102 = vmatprep.subr.mxu0 0.0
    %103 = vmatpush1.xpose.msra.mxu0 0.0
    %104 = vmatprep.subr.mxu0 0.0
    %105 = vmatpush1.xpose.msra.mxu0 0.0
    %106 = vmatprep.subr.mxu0 0.0
    %107 = vmatpush1.xpose.msra.mxu0 0.0
    %108 = vmatprep.subr.mxu0 0.0
    %109 = vmatpush1.xpose.msra.mxu0 0.0
    %110 = vmatprep.subr.mxu0 0.0
    %111 = vmatpush1.xpose.msra.mxu0 0.0
    %v112 = vand.u32 %v27, 4294901760
    %v113 = vsub.f32 %v27, %v112
    %v114 = vand.u32 %v113, 4294901760
    %v115 = vsub.f32 %v113, %v114
    %v116 = vand.u32 %v115, 4294901760
    %117 = vmatprep.mubr.f32.mxu0 %v116
    %v118 = vand.u32 %v26, 4294901760
    %v119 = vsub.f32 %v26, %v118
    %v120 = vand.u32 %v119, 4294901760
    %v121 = vsub.f32 %v119, %v120
    %v122 = vand.u32 %v121, 4294901760
    %123 = vmatmul.mubr.f32.gmra.mrb[0].mxu0 %v122
    %v124 = vpop.f32.mrb[0].mxu0
    %v125 = vadd.f32 %v33, %v124
    %v126 = vpop.f32.mrb[0].mxu0
    %127 = vdwg.mxu0
    %v128 = vand.u32 %v43, 4294901760
    %v129 = vsub.f32 %v43, %v128
    %v130 = vand.u32 %v129, 4294901760
    %v131 = vsub.f32 %v129, %v130
    %v132 = vand.u32 %v131, 4294901760
    %133 = vmatprep.subr.mxu0 %v132
    %v134 = vand.u32 %v42, 4294901760
    %v135 = vsub.f32 %v42, %v134
    %v136 = vand.u32 %v135, 4294901760
    %v137 = vsub.f32 %v135, %v136
    %v138 = vand.u32 %v137, 4294901760
    %139 = vmatpush1.xpose.msra.mxu0 %v138
    %140 = vmatprep.subr.mxu0 0.0
    %141 = vmatpush1.xpose.msra.mxu0 0.0
    %142 = vmatprep.subr.mxu0 0.0
    %143 = vmatpush1.xpose.msra.mxu0 0.0
    %144 = vmatprep.subr.mxu0 0.0
    %145 = vmatpush1.xpose.msra.mxu0 0.0
    %146 = vmatprep.subr.mxu0 0.0
    %147 = vmatpush1.xpose.msra.mxu0 0.0
    %148 = vmatprep.subr.mxu0 0.0
    %149 = vmatpush1.xpose.msra.mxu0 0.0
    %150 = vmatprep.subr.mxu0 0.0
    %151 = vmatpush1.xpose.msra.mxu0 0.0
    %152 = vmatprep.subr.mxu0 0.0
    %153 = vmatpush1.xpose.msra.mxu0 0.0
    %154 = vmatprep.subr.mxu0 0.0
    %155 = vmatpush1.xpose.msra.mxu0 0.0
    %156 = vmatprep.subr.mxu0 0.0
    %157 = vmatpush1.xpose.msra.mxu0 0.0
    %158 = vmatprep.subr.mxu0 0.0
    %159 = vmatpush1.xpose.msra.mxu0 0.0
    %160 = vmatprep.subr.mxu0 0.0
    %161 = vmatpush1.xpose.msra.mxu0 0.0
    %162 = vmatprep.subr.mxu0 0.0
    %163 = vmatpush1.xpose.msra.mxu0 0.0
    %164 = vmatprep.subr.mxu0 0.0
    %165 = vmatpush1.xpose.msra.mxu0 0.0
    %166 = vmatprep.subr.mxu0 0.0
    %167 = vmatpush1.xpose.msra.mxu0 0.0
    %168 = vmatprep.subr.mxu0 0.0
    %169 = vmatpush1.xpose.msra.mxu0 0.0
    %170 = vmatprep.subr.mxu0 0.0
    %171 = vmatpush1.xpose.msra.mxu0 0.0
    %172 = vmatprep.subr.mxu0 0.0
    %173 = vmatpush1.xpose.msra.mxu0 0.0
    %174 = vmatprep.subr.mxu0 0.0
    %175 = vmatpush1.xpose.msra.mxu0 0.0
    %176 = vmatprep.subr.mxu0 0.0
    %177 = vmatpush1.xpose.msra.mxu0 0.0
    %178 = vmatprep.subr.mxu0 0.0
    %179 = vmatpush1.xpose.msra.mxu0 0.0
    %180 = vmatprep.subr.mxu0 0.0
    %181 = vmatpush1.xpose.msra.mxu0 0.0
    %182 = vmatprep.subr.mxu0 0.0
    %183 = vmatpush1.xpose.msra.mxu0 0.0
    %184 = vmatprep.subr.mxu0 0.0
    %185 = vmatpush1.xpose.msra.mxu0 0.0
    %186 = vmatprep.subr.mxu0 0.0
    %187 = vmatpush1.xpose.msra.mxu0 0.0
    %188 = vmatprep.subr.mxu0 0.0
    %189 = vmatpush1.xpose.msra.mxu0 0.0
    %190 = vmatprep.subr.mxu0 0.0
    %191 = vmatpush1.xpose.msra.mxu0 0.0
    %192 = vmatprep.subr.mxu0 0.0
    %193 = vmatpush1.xpose.msra.mxu0 0.0
    %194 = vmatprep.subr.mxu0 0.0
    %195 = vmatpush1.xpose.msra.mxu0 0.0
    %196 = vmatprep.subr.mxu0 0.0
    %197 = vmatpush1.xpose.msra.mxu0 0.0
    %198 = vmatprep.subr.mxu0 0.0
    %199 = vmatpush1.xpose.msra.mxu0 0.0
    %200 = vmatprep.subr.mxu0 0.0
    %201 = vmatpush1.xpose.msra.mxu0 0.0
    %v202 = vand.u32 %v27, 4294901760
    %203 = vmatprep.mubr.f32.mxu0 %v202
    %v204 = vand.u32 %v26, 4294901760
    %205 = vmatmul.mubr.f32.gmra.mrb[0].mxu0 %v204
    %v206 = vpop.f32.mrb[0].mxu0
    %v207 = vadd.f32 %v125, %v206
    %v208 = vpop.f32.mrb[0].mxu0
    %209 = vdwg.mxu0
    %v210 = vand.u32 %v43, 4294901760
    %v211 = vsub.f32 %v43, %v210
    %212 = vmatprep.subr.mxu0 %v211
    %v213 = vand.u32 %v42, 4294901760
    %v214 = vsub.f32 %v42, %v213
    %215 = vmatpush1.xpose.msra.mxu0 %v214
    %216 = vmatprep.subr.mxu0 0.0
    %217 = vmatpush1.xpose.msra.mxu0 0.0
    %218 = vmatprep.subr.mxu0 0.0
    %219 = vmatpush1.xpose.msra.mxu0 0.0
    %220 = vmatprep.subr.mxu0 0.0
    %221 = vmatpush1.xpose.msra.mxu0 0.0
    %222 = vmatprep.subr.mxu0 0.0
    %223 = vmatpush1.xpose.msra.mxu0 0.0
    %224 = vmatprep.subr.mxu0 0.0
    %225 = vmatpush1.xpose.msra.mxu0 0.0
    %226 = vmatprep.subr.mxu0 0.0
    %227 = vmatpush1.xpose.msra.mxu0 0.0
    %228 = vmatprep.subr.mxu0 0.0
    %229 = vmatpush1.xpose.msra.mxu0 0.0
    %230 = vmatprep.subr.mxu0 0.0
    %231 = vmatpush1.xpose.msra.mxu0 0.0
    %232 = vmatprep.subr.mxu0 0.0
    %233 = vmatpush1.xpose.msra.mxu0 0.0
    %234 = vmatprep.subr.mxu0 0.0
    %235 = vmatpush1.xpose.msra.mxu0 0.0
    %236 = vmatprep.subr.mxu0 0.0
    %237 = vmatpush1.xpose.msra.mxu0 0.0
    %238 = vmatprep.subr.mxu0 0.0
    %239 = vmatpush1.xpose.msra.mxu0 0.0
    %240 = vmatprep.subr.mxu0 0.0
    %241 = vmatpush1.xpose.msra.mxu0 0.0
    %242 = vmatprep.subr.mxu0 0.0
    %243 = vmatpush1.xpose.msra.mxu0 0.0
    %244 = vmatprep.subr.mxu0 0.0
    %245 = vmatpush1.xpose.msra.mxu0 0.0
    %246 = vmatprep.subr.mxu0 0.0
    %247 = vmatpush1.xpose.msra.mxu0 0.0
    %248 = vmatprep.subr.mxu0 0.0
    %249 = vmatpush1.xpose.msra.mxu0 0.0
    %250 = vmatprep.subr.mxu0 0.0
    %251 = vmatpush1.xpose.msra.mxu0 0.0
    %252 = vmatprep.subr.mxu0 0.0
    %253 = vmatpush1.xpose.msra.mxu0 0.0
    %254 = vmatprep.subr.mxu0 0.0
    %255 = vmatpush1.xpose.msra.mxu0 0.0
    %256 = vmatprep.subr.mxu0 0.0
    %257 = vmatpush1.xpose.msra.mxu0 0.0
    %258 = vmatprep.subr.mxu0 0.0
    %259 = vmatpush1.xpose.msra.mxu0 0.0
    %260 = vmatprep.subr.mxu0 0.0
    %261 = vmatpush1.xpose.msra.mxu0 0.0
    %262 = vmatprep.subr.mxu0 0.0
    %263 = vmatpush1.xpose.msra.mxu0 0.0
    %264 = vmatprep.subr.mxu0 0.0
    %265 = vmatpush1.xpose.msra.mxu0 0.0
    %266 = vmatprep.subr.mxu0 0.0
    %267 = vmatpush1.xpose.msra.mxu0 0.0
    %268 = vmatprep.subr.mxu0 0.0
    %269 = vmatpush1.xpose.msra.mxu0 0.0
    %270 = vmatprep.subr.mxu0 0.0
    %271 = vmatpush1.xpose.msra.mxu0 0.0
    %272 = vmatprep.subr.mxu0 0.0
    %273 = vmatpush1.xpose.msra.mxu0 0.0
    %274 = vmatprep.subr.mxu0 0.0
    %275 = vmatpush1.xpose.msra.mxu0 0.0
    %276 = vmatprep.subr.mxu0 0.0
    %277 = vmatpush1.xpose.msra.mxu0 0.0
    %v278 = vand.u32 %v27, 4294901760
    %v279 = vsub.f32 %v27, %v278
    %280 = vmatprep.mubr.f32.mxu0 %v279
    %v281 = vand.u32 %v26, 4294901760
    %v282 = vsub.f32 %v26, %v281
    %283 = vmatmul.mubr.f32.gmra.mrb[0].mxu0 %v282
    %v284 = vpop.f32.mrb[0].mxu0
    %v285 = vadd.f32 %v207, %v284
    %v286 = vpop.f32.mrb[0].mxu0
    %287 = vdwg.mxu0
    %v288 = vand.u32 %v43, 4294901760
    %289 = vmatprep.subr.mxu0 %v288
    %v290 = vand.u32 %v42, 4294901760
    %291 = vmatpush1.xpose.msra.mxu0 %v290
    %292 = vmatprep.subr.mxu0 0.0
    %293 = vmatpush1.xpose.msra.mxu0 0.0
    %294 = vmatprep.subr.mxu0 0.0
    %295 = vmatpush1.xpose.msra.mxu0 0.0
    %296 = vmatprep.subr.mxu0 0.0
    %297 = vmatpush1.xpose.msra.mxu0 0.0
    %298 = vmatprep.subr.mxu0 0.0
    %299 = vmatpush1.xpose.msra.mxu0 0.0
    %300 = vmatprep.subr.mxu0 0.0
    %301 = vmatpush1.xpose.msra.mxu0 0.0
    %302 = vmatprep.subr.mxu0 0.0
    %303 = vmatpush1.xpose.msra.mxu0 0.0
    %304 = vmatprep.subr.mxu0 0.0
    %305 = vmatpush1.xpose.msra.mxu0 0.0
    %306 = vmatprep.subr.mxu0 0.0
    %307 = vmatpush1.xpose.msra.mxu0 0.0
    %308 = vmatprep.subr.mxu0 0.0
    %309 = vmatpush1.xpose.msra.mxu0 0.0
    %310 = vmatprep.subr.mxu0 0.0
    %311 = vmatpush1.xpose.msra.mxu0 0.0
    %312 = vmatprep.subr.mxu0 0.0
    %313 = vmatpush1.xpose.msra.mxu0 0.0
    %314 = vmatprep.subr.mxu0 0.0
    %315 = vmatpush1.xpose.msra.mxu0 0.0
    %316 = vmatprep.subr.mxu0 0.0
    %317 = vmatpush1.xpose.msra.mxu0 0.0
    %318 = vmatprep.subr.mxu0 0.0
    %319 = vmatpush1.xpose.msra.mxu0 0.0
    %320 = vmatprep.subr.mxu0 0.0
    %321 = vmatpush1.xpose.msra.mxu0 0.0
    %322 = vmatprep.subr.mxu0 0.0
    %323 = vmatpush1.xpose.msra.mxu0 0.0
    %324 = vmatprep.subr.mxu0 0.0
    %325 = vmatpush1.xpose.msra.mxu0 0.0
    %326 = vmatprep.subr.mxu0 0.0
    %327 = vmatpush1.xpose.msra.mxu0 0.0
    %328 = vmatprep.subr.mxu0 0.0
    %329 = vmatpush1.xpose.msra.mxu0 0.0
    %330 = vmatprep.subr.mxu0 0.0
    %331 = vmatpush1.xpose.msra.mxu0 0.0
    %332 = vmatprep.subr.mxu0 0.0
    %333 = vmatpush1.xpose.msra.mxu0 0.0
    %334 = vmatprep.subr.mxu0 0.0
    %335 = vmatpush1.xpose.msra.mxu0 0.0
    %336 = vmatprep.subr.mxu0 0.0
    %337 = vmatpush1.xpose.msra.mxu0 0.0
    %338 = vmatprep.subr.mxu0 0.0
    %339 = vmatpush1.xpose.msra.mxu0 0.0
    %340 = vmatprep.subr.mxu0 0.0
    %341 = vmatpush1.xpose.msra.mxu0 0.0
    %342 = vmatprep.subr.mxu0 0.0
    %343 = vmatpush1.xpose.msra.mxu0 0.0
    %344 = vmatprep.subr.mxu0 0.0
    %345 = vmatpush1.xpose.msra.mxu0 0.0
    %346 = vmatprep.subr.mxu0 0.0
    %347 = vmatpush1.xpose.msra.mxu0 0.0
    %348 = vmatprep.subr.mxu0 0.0
    %349 = vmatpush1.xpose.msra.mxu0 0.0
    %350 = vmatprep.subr.mxu0 0.0
    %351 = vmatpush1.xpose.msra.mxu0 0.0
    %352 = vmatprep.subr.mxu0 0.0
    %353 = vmatpush1.xpose.msra.mxu0 0.0
    %v354 = vand.u32 %v27, 4294901760
    %v355 = vsub.f32 %v27, %v354
    %v356 = vand.u32 %v355, 4294901760
    %357 = vmatprep.mubr.f32.mxu0 %v356
    %v358 = vand.u32 %v26, 4294901760
    %v359 = vsub.f32 %v26, %v358
    %v360 = vand.u32 %v359, 4294901760
    %361 = vmatmul.mubr.f32.gmra.mrb[0].mxu0 %v360
    %v362 = vpop.f32.mrb[0].mxu0
    %v363 = vadd.f32 %v285, %v362
    %v364 = vpop.f32.mrb[0].mxu0
    %365 = vdwg.mxu0
    %v366 = vand.u32 %v43, 4294901760
    %v367 = vsub.f32 %v43, %v366
    %v368 = vand.u32 %v367, 4294901760
    %369 = vmatprep.subr.mxu0 %v368
    %v370 = vand.u32 %v42, 4294901760
    %v371 = vsub.f32 %v42, %v370
    %v372 = vand.u32 %v371, 4294901760
    %373 = vmatpush1.xpose.msra.mxu0 %v372
    %374 = vmatprep.subr.mxu0 0.0
    %375 = vmatpush1.xpose.msra.mxu0 0.0
    %376 = vmatprep.subr.mxu0 0.0
    %377 = vmatpush1.xpose.msra.mxu0 0.0
    %378 = vmatprep.subr.mxu0 0.0
    %379 = vmatpush1.xpose.msra.mxu0 0.0
    %380 = vmatprep.subr.mxu0 0.0
    %381 = vmatpush1.xpose.msra.mxu0 0.0
    %382 = vmatprep.subr.mxu0 0.0
    %383 = vmatpush1.xpose.msra.mxu0 0.0
    %384 = vmatprep.subr.mxu0 0.0
    %385 = vmatpush1.xpose.msra.mxu0 0.0
    %386 = vmatprep.subr.mxu0 0.0
    %387 = vmatpush1.xpose.msra.mxu0 0.0
    %388 = vmatprep.subr.mxu0 0.0
    %389 = vmatpush1.xpose.msra.mxu0 0.0
    %390 = vmatprep.subr.mxu0 0.0
    %391 = vmatpush1.xpose.msra.mxu0 0.0
    %392 = vmatprep.subr.mxu0 0.0
    %393 = vmatpush1.xpose.msra.mxu0 0.0
    %394 = vmatprep.subr.mxu0 0.0
    %395 = vmatpush1.xpose.msra.mxu0 0.0
    %396 = vmatprep.subr.mxu0 0.0
    %397 = vmatpush1.xpose.msra.mxu0 0.0
    %398 = vmatprep.subr.mxu0 0.0
    %399 = vmatpush1.xpose.msra.mxu0 0.0
    %400 = vmatprep.subr.mxu0 0.0
    %401 = vmatpush1.xpose.msra.mxu0 0.0
    %402 = vmatprep.subr.mxu0 0.0
    %403 = vmatpush1.xpose.msra.mxu0 0.0
    %404 = vmatprep.subr.mxu0 0.0
    %405 = vmatpush1.xpose.msra.mxu0 0.0
    %406 = vmatprep.subr.mxu0 0.0
    %407 = vmatpush1.xpose.msra.mxu0 0.0
    %408 = vmatprep.subr.mxu0 0.0
    %409 = vmatpush1.xpose.msra.mxu0 0.0
    %410 = vmatprep.subr.mxu0 0.0
    %411 = vmatpush1.xpose.msra.mxu0 0.0
    %412 = vmatprep.subr.mxu0 0.0
    %413 = vmatpush1.xpose.msra.mxu0 0.0
    %414 = vmatprep.subr.mxu0 0.0
    %415 = vmatpush1.xpose.msra.mxu0 0.0
    %416 = vmatprep.subr.mxu0 0.0
    %417 = vmatpush1.xpose.msra.mxu0 0.0
    %418 = vmatprep.subr.mxu0 0.0
    %419 = vmatpush1.xpose.msra.mxu0 0.0
    %420 = vmatprep.subr.mxu0 0.0
    %421 = vmatpush1.xpose.msra.mxu0 0.0
    %422 = vmatprep.subr.mxu0 0.0
    %423 = vmatpush1.xpose.msra.mxu0 0.0
    %424 = vmatprep.subr.mxu0 0.0
    %425 = vmatpush1.xpose.msra.mxu0 0.0
    %426 = vmatprep.subr.mxu0 0.0
    %427 = vmatpush1.xpose.msra.mxu0 0.0
    %428 = vmatprep.subr.mxu0 0.0
    %429 = vmatpush1.xpose.msra.mxu0 0.0
    %430 = vmatprep.subr.mxu0 0.0
    %431 = vmatpush1.xpose.msra.mxu0 0.0
    %432 = vmatprep.subr.mxu0 0.0
    %433 = vmatpush1.xpose.msra.mxu0 0.0
    %434 = vmatprep.subr.mxu0 0.0
    %435 = vmatpush1.xpose.msra.mxu0 0.0
    %v436 = vand.u32 %v27, 4294901760
    %437 = vmatprep.mubr.f32.mxu0 %v436
    %v438 = vand.u32 %v26, 4294901760
    %439 = vmatmul.mubr.f32.gmra.mrb[0].mxu0 %v438
    %v440 = vpop.f32.mrb[0].mxu0
    %v441 = vadd.f32 %v363, %v440
    %v442 = vpop.f32.mrb[0].mxu0
    %443 = vdwg.mxu0
    %v444 = vand.u32 %v43, 4294901760
    %445 = vmatprep.subr.mxu0 %v444
    %v446 = vand.u32 %v42, 4294901760
    %447 = vmatpush1.xpose.msra.mxu0 %v446
    %448 = vmatprep.subr.mxu0 0.0
    %449 = vmatpush1.xpose.msra.mxu0 0.0
    %450 = vmatprep.subr.mxu0 0.0
    %451 = vmatpush1.xpose.msra.mxu0 0.0
    %452 = vmatprep.subr.mxu0 0.0
    %453 = vmatpush1.xpose.msra.mxu0 0.0
    %454 = vmatprep.subr.mxu0 0.0
    %455 = vmatpush1.xpose.msra.mxu0 0.0
    %456 = vmatprep.subr.mxu0 0.0
    %457 = vmatpush1.xpose.msra.mxu0 0.0
    %458 = vmatprep.subr.mxu0 0.0
    %459 = vmatpush1.xpose.msra.mxu0 0.0
    %460 = vmatprep.subr.mxu0 0.0
    %461 = vmatpush1.xpose.msra.mxu0 0.0
    %462 = vmatprep.subr.mxu0 0.0
    %463 = vmatpush1.xpose.msra.mxu0 0.0
    %464 = vmatprep.subr.mxu0 0.0
    %465 = vmatpush1.xpose.msra.mxu0 0.0
    %466 = vmatprep.subr.mxu0 0.0
    %467 = vmatpush1.xpose.msra.mxu0 0.0
    %468 = vmatprep.subr.mxu0 0.0
    %469 = vmatpush1.xpose.msra.mxu0 0.0
    %470 = vmatprep.subr.mxu0 0.0
    %471 = vmatpush1.xpose.msra.mxu0 0.0
    %472 = vmatprep.subr.mxu0 0.0
    %473 = vmatpush1.xpose.msra.mxu0 0.0
    %474 = vmatprep.subr.mxu0 0.0
    %475 = vmatpush1.xpose.msra.mxu0 0.0
    %476 = vmatprep.subr.mxu0 0.0
    %477 = vmatpush1.xpose.msra.mxu0 0.0
    %478 = vmatprep.subr.mxu0 0.0
    %479 = vmatpush1.xpose.msra.mxu0 0.0
    %480 = vmatprep.subr.mxu0 0.0
    %481 = vmatpush1.xpose.msra.mxu0 0.0
    %482 = vmatprep.subr.mxu0 0.0
    %483 = vmatpush1.xpose.msra.mxu0 0.0
    %484 = vmatprep.subr.mxu0 0.0
    %485 = vmatpush1.xpose.msra.mxu0 0.0
    %486 = vmatprep.subr.mxu0 0.0
    %487 = vmatpush1.xpose.msra.mxu0 0.0
    %488 = vmatprep.subr.mxu0 0.0
    %489 = vmatpush1.xpose.msra.mxu0 0.0
    %490 = vmatprep.subr.mxu0 0.0
    %491 = vmatpush1.xpose.msra.mxu0 0.0
    %492 = vmatprep.subr.mxu0 0.0
    %493 = vmatpush1.xpose.msra.mxu0 0.0
    %494 = vmatprep.subr.mxu0 0.0
    %495 = vmatpush1.xpose.msra.mxu0 0.0
    %496 = vmatprep.subr.mxu0 0.0
    %497 = vmatpush1.xpose.msra.mxu0 0.0
    %498 = vmatprep.subr.mxu0 0.0
    %499 = vmatpush1.xpose.msra.mxu0 0.0
    %500 = vmatprep.subr.mxu0 0.0
    %501 = vmatpush1.xpose.msra.mxu0 0.0
    %502 = vmatprep.subr.mxu0 0.0
    %503 = vmatpush1.xpose.msra.mxu0 0.0
    %504 = vmatprep.subr.mxu0 0.0
    %505 = vmatpush1.xpose.msra.mxu0 0.0
    %506 = vmatprep.subr.mxu0 0.0
    %507 = vmatpush1.xpose.msra.mxu0 0.0
    %508 = vmatprep.subr.mxu0 0.0
    %509 = vmatpush1.xpose.msra.mxu0 0.0
    %v510 = vand.u32 %v27, 4294901760
    %511 = vmatprep.mubr.f32.mxu0 %v510
    %v512 = vand.u32 %v26, 4294901760
    %513 = vmatmul.mubr.f32.gmra.mrb[0].mxu0 %v512
    %v514 = vpop.f32.mrb[0].mxu0
    %v515 = vadd.f32 %v441, %v514
    %v516 = vpop.f32.mrb[0].mxu0
    %517 = vdwg.mxu0
    %vm518 = vcmask 15360
    %519 = vst.msk [vmem:[%s3] sm:$0xff] %vm518, %v515
    // Predicated region
    $region18: #{tpu_custom_call.1} parent=1 // pred_check
      _
    $region19: #{tpu_custom_call.1} parent=1 // pred_check_branch
      %521 = sbr.rel (0) target = $region21
    $region20: #{tpu_custom_call.1} parent=1 // pred_region
      _
    $region21: #{tpu_custom_call.1} parent=1 // pred_fallthru
      _
    // Predicated region
    $region22: #{tpu_custom_call.1} parent=1 // pred_check
      _
    $region23: #{tpu_custom_call.1} parent=1 // pred_check_branch
      %523 = sbr.rel (0) target = $region25
    $region24: #{tpu_custom_call.1} parent=1 // pred_region
      _
    $region25: #{tpu_custom_call.1} parent=1 // pred_fallthru
      _
    %524 = vsyncpa [#allocation3], 1

</llo_original>
